<compile_context>
chip_gen: v7x
topology: tpu7x:2x2x1
jax: 0.10.0
libtpu: 0.0.40
codegen_flags: <defaults>
</compile_context>

<pallas_src>
import functools

import jax
import jax.numpy as jnp
from jax import lax
from jax.experimental import pallas as pl
from jax.experimental.pallas import tpu as pltpu


_MAX_LABEL_TILE = 2048                       # lane-tile cap (multiple of 128)
_DEFAULT_BLOCK_BYTES = 6 * 1024 * 1024       # ~6 MiB per input per grid step
_VMEM_HEADROOM = 4 * 1024 * 1024             # compiler-internal scratch margin
_VMEM_CAP = 48 * 1024 * 1024                 # stay well under v7x's 64 MiB VMEM

# torch.sigmoid in f32 is 1/(1+exp(-x)); it rounds to exactly 1.0 above
# _SIGMOID_ONE_X (exp(-x) < 2^-24) and to exactly 0.0 below _SIGMOID_ZERO_X
# (exp(-x) overflows to +inf).  There nn.BCELoss clamps log(0) = -inf to -100,
# so the corresponding negated log term is exactly 100.
_SIGMOID_ONE_X = 16.635532
_SIGMOID_ZERO_X = -88.72284


def _round_up(x, m):
    return ((x + m - 1) // m) * m


def _choose_tiles(n_rows, n_cols, itemsize, target_block_bytes):
    """Pick a (rows, labels) block: multi-MiB, balanced, VMEM-safe, >=2 tiles."""
    target_elems = max(8 * 128, target_block_bytes // itemsize)

    # Label (lane) tile: full label dim when it fits, otherwise cdiv-balanced
    # multiples of 128 so the ragged tail wastes <128 lanes of DMA per row.
    if n_cols <= _MAX_LABEL_TILE:
        tl = n_cols
    else:
        n_col_tiles = pl.cdiv(n_cols, _MAX_LABEL_TILE)
        tl = _round_up(pl.cdiv(n_cols, n_col_tiles), 128)

    # Row (sublane) tile: multiple of 8 near the byte target, balanced across
    # tiles so the last tile is as full as possible.
    tb_target = max(8, (target_elems // max(tl, 1)) // 8 * 8)
    if tb_target >= n_rows:
        tb = n_rows
    else:
        n_row_tiles = pl.cdiv(n_rows, tb_target)
        tb = _round_up(pl.cdiv(n_rows, n_row_tiles), 8)

    # Guarantee >= 2 grid steps when possible so the fully-"parallel" grid
    # actually shards across both TensorCores on v7x (megacore).
    if pl.cdiv(n_rows, tb) * pl.cdiv(n_cols, tl) < 2:
        if n_rows > 8:
            tb = _round_up(pl.cdiv(n_rows, 2), 8)
        elif n_cols > 128:
            tl = _round_up(pl.cdiv(n_cols, 2), 128)
    return tb, tl


def _bce_kernel(logits_ref, target_ref, out_ref, *, n_rows, n_cols,
                block_rows, block_cols, mask_rows, mask_cols):
    i = pl.program_id(0)               # row tile   ("parallel")
    j = pl.program_id(1)               # label tile ("parallel")

    x = logits_ref[...].astype(jnp.float32)
    t = target_ref[...].astype(jnp.float32)

    # Fused, numerically stable BCE(sigmoid(x), t):
    #   softplus(x)          = max(x, 0) + log1p(exp(-|x|))
    #   -log(sigmoid(x))     = softplus(-x) = softplus(x) - x
    #   -log(1 - sigmoid(x)) = softplus(x)
    # nn.BCELoss clamps each log term at -100 -> clamp the negated terms at
    # 100.  The two jnp.where selects reproduce torch's f32 sigmoid saturation
    # (p rounds to exactly 1.0 / 0.0), where torch's clamped term is exactly
    # 100; they are plain VPU ops, free in this HBM-bound regime.
    sp = jnp.maximum(x, 0.0) + jnp.log1p(jnp.exp(-jnp.abs(x)))
    neg_log_p = jnp.where(x < _SIGMOID_ZERO_X, 100.0,
                          jnp.minimum(sp - x, 100.0))
    neg_log_1mp = jnp.where(x > _SIGMOID_ONE_X, 100.0,
                            jnp.minimum(sp, 100.0))
    loss = neg_log_1mp + t * (neg_log_p - neg_log_1mp)

    if mask_rows or mask_cols:         # static flags: traced only when ragged
        # NOTE: also paid on interior tiles; a few VPU ops/elem are free filler
        # here (only marginally visible on v7x with bf16 inputs).
        valid = None
        if mask_rows:
            rows = i * block_rows + lax.broadcasted_iota(jnp.int32, loss.shape, 0)
            valid = rows < n_rows
        if mask_cols:
            cols = j * block_cols + lax.broadcasted_iota(jnp.int32, loss.shape, 1)
            cvalid = cols < n_cols
            valid = cvalid if valid is None else valid & cvalid
        loss = jnp.where(valid, loss, 0.0)

    # One cross-lane/sublane reduction per multi-MiB block (XLU slot), then a
    # single unmasked lane-dense (8, 128) store -- one vreg store per step, no
    # accumulator scratch, no per-step read-modify-write.
    total = jnp.sum(loss)
    r = lax.broadcasted_iota(jnp.int32, (8, 128), 0)
    c = lax.broadcasted_iota(jnp.int32, (8, 128), 1)
    out_ref[...] = jnp.where((r == 0) & (c == 0), total, 0.0)


def multi_label_bce_loss(logits, target, *,
                         target_block_bytes=_DEFAULT_BLOCK_BYTES):
    """Pallas implementation of MultiLabelBinaryCrossEntropyLoss.forward.

    logits/target may be f32, bf16 or integer/bool (cast to f32 in-kernel);
    lower-precision inputs halve the HBM bytes moved for this streaming kernel.
    """
    assert logits.shape == target.shape and logits.ndim == 2
    n_rows, n_cols = logits.shape
    it_l = jnp.dtype(logits.dtype).itemsize
    it_t = jnp.dtype(target.dtype).itemsize
    tb, tl = _choose_tiles(n_rows, n_cols, max(it_l, it_t), target_block_bytes)
    grid_rows = pl.cdiv(n_rows, tb)
    grid_cols = pl.cdiv(n_cols, tl)

    # VMEM budget from the chosen tile: 2 pipeline buffers per input (padded to
    # the (8, 128) layout) + double-buffered (8,128) output + headroom, capped
    # so it is always safe under v7x's 64 MiB physical VMEM.
    tb_pad, tl_pad = _round_up(tb, 8), _round_up(tl, 128)
    in_bytes = 2 * tb_pad * tl_pad * (it_l + it_t)
    vmem_limit = int(min(in_bytes + 2 * 8 * 128 * 4 + _VMEM_HEADROOM, _VMEM_CAP))

    kernel = functools.partial(
        _bce_kernel,
        n_rows=n_rows, n_cols=n_cols,
        block_rows=tb, block_cols=tl,
        mask_rows=(n_rows % tb) != 0,
        mask_cols=(n_cols % tl) != 0,
    )

    partials = pl.pallas_call(
        kernel,
        out_shape=jax.ShapeDtypeStruct((grid_rows * 8, grid_cols * 128),
                                       jnp.float32),
        grid_spec=pltpu.PrefetchScalarGridSpec(
            num_scalar_prefetch=0,
            grid=(grid_rows, grid_cols),
            in_specs=[
                pl.BlockSpec((tb, tl), lambda i, j: (i, j)),
                pl.BlockSpec((tb, tl), lambda i, j: (i, j)),
            ],
            out_specs=pl.BlockSpec((8, 128), lambda i, j: (i, j)),
        ),
        compiler_params=pltpu.CompilerParams(
            dimension_semantics=("parallel", "parallel"),
            vmem_limit_bytes=vmem_limit,
        ),
    )(logits, target)

    # Tiny cross-tile reduction + mean scaling in plain XLA.
    return jnp.sum(partials) / float(n_rows * n_cols)


def _reference_torch_path(logits, target):
    """Literal PyTorch path: p = 1/(1+exp(-x)) (torch.sigmoid in f32), then
    nn.BCELoss with its log terms clamped at -100, mean reduction."""
    x = logits.astype(jnp.float32)
    t = target.astype(jnp.float32)
    p = 1.0 / (1.0 + jnp.exp(-x))
    log_p = jnp.maximum(jnp.log(p), -100.0)
    log_1mp = jnp.maximum(jnp.log(1.0 - p), -100.0)
    return jnp.mean(-(t * log_p + (1.0 - t) * log_1mp))


if __name__ == "__main__":
    key = jax.random.PRNGKey(0)

    def make_inputs(k, shape, logit_dtype=jnp.float32, scale=3.0):
        k1, k2 = jax.random.split(k)
        logits = (jax.random.normal(k1, shape, dtype=jnp.float32) * scale)
        logits = logits.astype(logit_dtype)
        target = jax.random.bernoulli(k2, p=0.3, shape=shape).astype(jnp.float32)
        return logits, target

    k1, k2, k3, key = jax.random.split(key, 4)

    # 1) Small shape; tile chooser forces >=2 row tiles (megacore occupancy).
    logits, target = make_inputs(k1, (64, 96))
    out = jax.block_until_ready(multi_label_bce_loss(logits, target))
    ref = _reference_torch_path(logits, target)
    assert jnp.allclose(out, ref, rtol=1e-4, atol=1e-5), (out, ref)

    # 2) Ragged shape with forced small blocks -> balanced multi-tile row grid.
    logits, target = make_inputs(k2, (200, 300))
    out = jax.block_until_ready(
        multi_label_bce_loss(logits, target, target_block_bytes=64 * 1024))
    ref = _reference_torch_path(logits, target)
    assert jnp.allclose(out, ref, rtol=1e-4, atol=1e-5), (out, ref)

    # 3) Wide label dim (balanced label tiles + column masking), bf16 logits.
    logits, target = make_inputs(k3, (16, 3000), logit_dtype=jnp.bfloat16)
    out = jax.block_until_ready(multi_label_bce_loss(logits, target))
    ref = _reference_torch_path(logits, target)
    assert jnp.allclose(out, ref, rtol=1e-4, atol=1e-5), (out, ref)

    # 4) Saturation regime: logits where f32 sigmoid rounds to exactly 0/1 and
    #    nn.BCELoss's -100 clamp kicks in (the reconciled corner case).
    xs = jnp.array([[-120., -95., -50., -20., -5., 0., 5., 20.],
                    [30., 50., 95., 120., -0.5, 2., -19., 18.]], jnp.float32)
    ts = jnp.array([[1., 1., 1., 1., 0., 1., 0., 0.],
                    [0., 0., 0., 0., 1., 1., 1., 0.]], jnp.float32)
    out = jax.block_until_ready(multi_label_bce_loss(xs, ts))
    ref = _reference_torch_path(xs, ts)
    assert jnp.allclose(out, ref, rtol=1e-4, atol=1e-4), (out, ref)

    print("KERNEL_OK")
</pallas_src>

<mosaic_0001>
module attributes {stable_mosaic.version = 11 : i64} {
  func.func @_bce_kernel(%arg0: i32, %arg1: i32, %arg2: memref<32x96xf32, #tpu.memory_space<vmem>>, %arg3: memref<32x96xf32, #tpu.memory_space<vmem>>, %arg4: memref<8x128xf32, #tpu.memory_space<vmem>>) attributes {dimension_semantics = [#tpu.dimension_semantics<parallel>, #tpu.dimension_semantics<parallel>], iteration_bounds = array<i64: 2, 1>, scalar_prefetch = 0 : i64, scratch_operands = 0 : i64, tpu.core_type = #tpu.core_type<tc>, window_params = [{transform_indices = @transform_0, window_bounds = array<i64: 32, 96>}, {transform_indices = @transform_1, window_bounds = array<i64: 32, 96>}, {transform_indices = @transform_2, window_bounds = array<i64: 8, 128>}]} {
    %c0 = arith.constant 0 : index
    %c0_0 = arith.constant 0 : index
    %0 = vector.load %arg2[%c0, %c0_0] : memref<32x96xf32, #tpu.memory_space<vmem>>, vector<32x96xf32>
    %c0_1 = arith.constant 0 : index
    %c0_2 = arith.constant 0 : index
    %1 = vector.load %arg3[%c0_1, %c0_2] : memref<32x96xf32, #tpu.memory_space<vmem>>, vector<32x96xf32>
    %cst = arith.constant 0.000000e+00 : f32
    %2 = vector.broadcast %cst : f32 to vector<32x96xf32>
    %3 = arith.maximumf %0, %2 : vector<32x96xf32>
    %4 = math.absf %0 : vector<32x96xf32>
    %cst_3 = arith.constant 0.000000e+00 : f32
    %5 = vector.broadcast %cst_3 : f32 to vector<32x96xf32>
    %6 = arith.subf %5, %4 : vector<32x96xf32>
    %7 = math.exp %6 : vector<32x96xf32>
    %8 = math.log1p %7 : vector<32x96xf32>
    %9 = arith.addf %3, %8 : vector<32x96xf32>
    %cst_4 = arith.constant -88.7228394 : f32
    %10 = vector.broadcast %cst_4 : f32 to vector<32x96xf32>
    %11 = arith.cmpf olt, %0, %10 : vector<32x96xf32>
    %12 = arith.subf %9, %0 : vector<32x96xf32>
    %cst_5 = arith.constant 1.000000e+02 : f32
    %13 = vector.broadcast %cst_5 : f32 to vector<32x96xf32>
    %14 = arith.minimumf %12, %13 : vector<32x96xf32>
    %cst_6 = arith.constant 1.000000e+02 : f32
    %15 = vector.broadcast %cst_6 : f32 to vector<32x96xf32>
    %16 = arith.select %11, %15, %14 : vector<32x96xi1>, vector<32x96xf32>
    %cst_7 = arith.constant 16.6355324 : f32
    %17 = vector.broadcast %cst_7 : f32 to vector<32x96xf32>
    %18 = arith.cmpf ogt, %0, %17 : vector<32x96xf32>
    %cst_8 = arith.constant 1.000000e+02 : f32
    %19 = vector.broadcast %cst_8 : f32 to vector<32x96xf32>
    %20 = arith.minimumf %9, %19 : vector<32x96xf32>
    %cst_9 = arith.constant 1.000000e+02 : f32
    %21 = vector.broadcast %cst_9 : f32 to vector<32x96xf32>
    %22 = arith.select %18, %21, %20 : vector<32x96xi1>, vector<32x96xf32>
    %23 = arith.subf %16, %22 : vector<32x96xf32>
    %24 = arith.mulf %1, %23 : vector<32x96xf32>
    %25 = arith.addf %22, %24 : vector<32x96xf32>
    %26 = vector.shape_cast %25 : vector<32x96xf32> to vector<1x32x96xf32>
    %cst_10 = arith.constant dense<0.000000e+00> : vector<1xf32>
    %27 = vector.multi_reduction <add>, %26, %cst_10 [1, 2] : vector<1x32x96xf32> to vector<1xf32>
    %28 = vector.shape_cast %27 : vector<1xf32> to vector<1x1x1xf32>
    %29 = vector.extract %28[0, 0, 0] : f32 from vector<1x1x1xf32>
    %30 = tpu.iota {dimensions = array<i32: 0>} : vector<8x128xi32>
    %31 = tpu.iota {dimensions = array<i32: 1>} : vector<8x128xi32>
    %c0_i32 = arith.constant 0 : i32
    %32 = vector.broadcast %c0_i32 : i32 to vector<8x128xi32>
    %33 = arith.cmpi eq, %30, %32 : vector<8x128xi32>
    %c0_i32_11 = arith.constant 0 : i32
    %34 = vector.broadcast %c0_i32_11 : i32 to vector<8x128xi32>
    %35 = arith.cmpi eq, %31, %34 : vector<8x128xi32>
    %36 = arith.andi %33, %35 : vector<8x128xi1>
    %cst_12 = arith.constant 0.000000e+00 : f32
    %37 = vector.broadcast %29 : f32 to vector<8x128xf32>
    %38 = vector.broadcast %cst_12 : f32 to vector<8x128xf32>
    %39 = arith.select %36, %37, %38 : vector<8x128xi1>, vector<8x128xf32>
    %c0_13 = arith.constant 0 : index
    %c0_14 = arith.constant 0 : index
    %40 = vector.load %arg4[%c0_13, %c0_14] : memref<8x128xf32, #tpu.memory_space<vmem>>, vector<8x128xf32>
    tpu.vector_store %arg4[%c0_13, %c0_14], %39 {strides = array<i32>} : memref<8x128xf32, #tpu.memory_space<vmem>>, vector<8x128xf32>,
    return
  }
  func.func @transform_0(%arg0: i32, %arg1: i32) -> (i32, i32) {
    %c0_i32 = arith.constant 0 : i32
    return %arg0, %arg1 : i32, i32
  }
  func.func @transform_1(%arg0: i32, %arg1: i32) -> (i32, i32) {
    %c0_i32 = arith.constant 0 : i32
    return %arg0, %arg1 : i32, i32
  }
  func.func @transform_2(%arg0: i32, %arg1: i32) -> (i32, i32) {
    %c0_i32 = arith.constant 0 : i32
    return %arg0, %arg1 : i32, i32
  }
}

</mosaic_0001>

<llo_original>
// kernel: tpu_custom_call.1
$region0: #{tpu_custom_call.1}
  #allocation0 [shape = 'u32[]', space=smem, size = 0x4, offset = 0x4, fixed_abs, tag = 'smem constant byte address 0x4 - core index']
  #allocation1 [shape = 'u32[144,128]{1,0:T(1,128)}', space=vmem, size = 0x12000, scoped, tag = 'internal scratch']
  %s0 = inlined_call_operand.hbm [shape: f32[64,96], index: 0, kind: input, shape index: {}]
  %s1 = inlined_call_operand.hbm [shape: f32[64,96], index: 1, kind: input, shape index: {}]
  %s2 = inlined_call_operand.hbm [shape: f32[16,128], index: 2, kind: output, shape index: {}]
  %s3 = sld [smem:[#allocation0]]
  $region49: #{tpu_custom_call.1} parent=0
    _
  %s5 = ssub.s32 1, %s3
  %s6 = scalar_select 0, %s5, %s3
  $region1: #{tpu_custom_call.1} parent=0
    #allocation2 [shape = 'u8[32768]{0}', space=vmem, size = 0x8000, scoped, tag = 'input window, operand 0']
    #allocation3 [shape = 's32[2]{0}', space=sflag, size = 0x8, scoped, tag = 'scoped memory for tpu_custom_call.1']
    #allocation4 [shape = 's32[2]{0}', space=sflag, size = 0x8, scoped, tag = 'scoped memory for tpu_custom_call.1']
    #allocation5 [shape = 'u8[32768]{0}', space=vmem, size = 0x8000, scoped, tag = 'input window, operand 1']
    #allocation6 [shape = 's32[2]{0}', space=sflag, size = 0x8, scoped, tag = 'scoped memory for tpu_custom_call.1']
    #allocation7 [shape = 'u8[8192]{0}', space=vmem, size = 0x2000, scoped, tag = 'output window, operand 0']
    %7 = vsyncpa [#allocation3], 0
    %s8 = scalar_lea.sflag [#allocation3], 1
    %9 = vsyncpa %s8, 0
    %10 = vsyncpa [#allocation6], 0
    %s11 = scalar_lea.sflag [#allocation6], 1
    %12 = vsyncpa %s11, 0
    %13 = vsyncpa [#allocation4], 0
    %s14 = scalar_lea.sflag [#allocation4], 1
    %15 = vsyncpa %s14, 0
    loop: start=0, step=1, limit=4
    $region2: #{tpu_custom_call.1} parent=1 // loop_pre_header
      _
    $region3: #{tpu_custom_call.1} parent=1 // loop_header
      %s17 = sphi 0, %s21
      %p18 = scmp.ge.s32.totalorder %s17, 4
      %s24 = sphi 0, %s36
      %s25 = sphi 0, %s32
      %s26 = sphi 0, %s24
      %s27 = sphi 0, %s25
      %s28 = sphi 0, %s26
      %s29 = sphi 0, %s27
      %s41 = sphi 0, %s43
      %s44 = sphi 0, %s41
      %s45 = sphi 0, %s44
      %s61 = sphi 0, %s45
      %s69 = sphi 0, %s71
      %s72 = sphi 0, %s69
      %s73 = sphi 0, %s72
      %s89 = sphi 0, %s73
      %s97 = sphi 0, %s99
      %s100 = sphi 0, %s97
      %s101 = sphi 0, %s100
      %s117 = sphi 0, %s101
    $region4: #{tpu_custom_call.1} parent=1 // loop_header_branch
      %20 = sbr.rel (%p18) target = $region8
    $region5: #{tpu_custom_call.1} parent=1 // loop_body
      %s22 = ssub.s32 %s17, 1
      %s23 = ssub.s32 %s17, 2
      %s30 = sadd.s32 1, %s25
      %p31 = scmp.ge.s32.totalorder %s30, 1
      %s32 = scalar_select %p31, 0, %s30
      %s33 = sadd.s32 1, %s24
      %s34 = scalar_select %p31, %s33, %s24
      %p35 = scmp.ge.s32.totalorder %s34, 2
      %s36 = scalar_select %p35, 0, %s34
      %s37 = ssub.s32 %s24, %s36
      %s38 = ssub.s32 %s25, %s32
      %s39 = sor.u32 %s37, %s38
      %p40 = scmp.eq.s32.totalorder %s39, 0
      %s42 = sadd.s32 %s41, 1
      %s43 = scalar_select %p40, %s41, %s42
      %p46 = pneg %p40
      %p47 = scmp.eq.s32.totalorder %s17, 1
      %p48 = por %p46, %p47
      %p49 = scmp.ne.s32.totalorder %s41, %s44
      %p50 = scmp.eq.s32.totalorder %s17, 0
      %p51 = por %p49, %p50
      %p52 = scmp.ne.s32.totalorder %s41, %s44
      %p53 = scmp.eq.s32.totalorder %s22, 1
      %p54 = por %p52, %p53
      %p55 = scmp.ne.s32.totalorder %s44, %s45
      %p56 = scmp.eq.s32.totalorder %s22, 0
      %p57 = por %p55, %p56
      %p58 = scmp.ne.s32.totalorder %s44, %s45
      %p59 = scmp.eq.s32.totalorder %s23, 1
      %p60 = por %p58, %p59
      %p62 = scmp.ne.s32.totalorder %s45, %s61
      %p63 = scmp.eq.s32.totalorder %s23, 0
      %p64 = por %p62, %p63
      %s65 = ssub.s32 %s24, %s36
      %s66 = ssub.s32 %s25, %s32
      %s67 = sor.u32 %s65, %s66
      %p68 = scmp.eq.s32.totalorder %s67, 0
      %s70 = sadd.s32 %s69, 1
      %s71 = scalar_select %p68, %s69, %s70
      %p74 = pneg %p68
      %p75 = scmp.eq.s32.totalorder %s17, 1
      %p76 = por %p74, %p75
      %p77 = scmp.ne.s32.totalorder %s69, %s72
      %p78 = scmp.eq.s32.totalorder %s17, 0
      %p79 = por %p77, %p78
      %p80 = scmp.ne.s32.totalorder %s69, %s72
      %p81 = scmp.eq.s32.totalorder %s22, 1
      %p82 = por %p80, %p81
      %p83 = scmp.ne.s32.totalorder %s72, %s73
      %p84 = scmp.eq.s32.totalorder %s22, 0
      %p85 = por %p83, %p84
      %p86 = scmp.ne.s32.totalorder %s72, %s73
      %p87 = scmp.eq.s32.totalorder %s23, 1
      %p88 = por %p86, %p87
      %p90 = scmp.ne.s32.totalorder %s73, %s89
      %p91 = scmp.eq.s32.totalorder %s23, 0
      %p92 = por %p90, %p91
      %s93 = ssub.s32 %s24, %s36
      %s94 = ssub.s32 %s25, %s32
      %s95 = sor.u32 %s93, %s94
      %p96 = scmp.eq.s32.totalorder %s95, 0
      %s98 = sadd.s32 %s97, 1
      %s99 = scalar_select %p96, %s97, %s98
      %p102 = pneg %p96
      %p103 = scmp.eq.s32.totalorder %s17, 1
      %p104 = por %p102, %p103
      %p105 = scmp.ne.s32.totalorder %s97, %s100
      %p106 = scmp.eq.s32.totalorder %s17, 0
      %p107 = por %p105, %p106
      %p108 = scmp.ne.s32.totalorder %s97, %s100
      %p109 = scmp.eq.s32.totalorder %s22, 1
      %p110 = por %p108, %p109
      %p111 = scmp.ne.s32.totalorder %s100, %s101
      %p112 = scmp.eq.s32.totalorder %s22, 0
      %p113 = por %p111, %p112
      %p114 = scmp.ne.s32.totalorder %s100, %s101
      %p115 = scmp.eq.s32.totalorder %s23, 1
      %p116 = por %p114, %p115
      %p118 = scmp.ne.s32.totalorder %s101, %s117
      %p119 = scmp.eq.s32.totalorder %s23, 0
      %p120 = por %p118, %p119
      %p121 = scmp.le.s32.totalorder 1, %s17
      %p122 = scmp.lt.s32.totalorder %s17, 3
      %p123 = pnand %p121, %p122
      %p124 = pneg %p123
      // Predicated region
      $region9: #{tpu_custom_call.1} parent=5 // pred_check
        _
      $region10: #{tpu_custom_call.1} parent=5 // pred_check_branch
        %126 = sbr.rel (%p123) target = $region12
      $region11: #{tpu_custom_call.1} parent=5 // pred_region
        %s127 = ssub.s32 %s17, 1
      $region12: #{tpu_custom_call.1} parent=5 // pred_fallthru
        _
      %p128 = scmp.lt.s32.totalorder %s17, 2
      // Predicated region
      $region13: #{tpu_custom_call.1} parent=5 // pred_check
        %p129 = pneg %p128
      $region14: #{tpu_custom_call.1} parent=5 // pred_check_branch
        %131 = sbr.rel (%p129) target = $region16
      $region15: #{tpu_custom_call.1} parent=5 // pred_region
        // Predicated region
        $region17: #{tpu_custom_call.1} parent=15 // pred_check
          %p132 = pneg %p51
        $region18: #{tpu_custom_call.1} parent=15 // pred_check_branch
          %134 = sbr.rel (%p132) target = $region20
        $region19: #{tpu_custom_call.1} parent=15 // pred_region
          %s135 = sand.u32 %s41, 1
          %s136 = scalar_lea.sflag [#allocation3], %s135
          %s137 = sand.u32 %s41, 1
          %s138 = smul.addr %s137, 32
          %s139 = scalar_lea.vmem [#allocation2], %s138
          %s140 = smul.u32 4, %s24
          %s142 = ssub.s32 512, 512
          %143 = vsyncadd %s136, %s142
          %s144 = sadd.s32 %s25, %s140
          %s145 = smul.addr %s144, 128
          %s146 = scalar_lea.hbm %s0, %s145
          %s147 = sshll.u32 %s139, 4
          %s148 = int_to_ptr.vmem [resolvable:$true] %s147
          %153 = dma.hbm_to_vmem [thread:$0]  %s146, 512, %s148, %s136, 128, 128, 8
        $region20: #{tpu_custom_call.1} parent=15 // pred_fallthru
          _
        // Predicated region
        $region21: #{tpu_custom_call.1} parent=15 // pred_check
          %p154 = pneg %p79
        $region22: #{tpu_custom_call.1} parent=15 // pred_check_branch
          %156 = sbr.rel (%p154) target = $region24
        $region23: #{tpu_custom_call.1} parent=15 // pred_region
          %s157 = sand.u32 %s69, 1
          %s158 = scalar_lea.sflag [#allocation6], %s157
          %s159 = sand.u32 %s69, 1
          %s160 = smul.addr %s159, 32
          %s161 = scalar_lea.vmem [#allocation5], %s160
          %s162 = smul.u32 4, %s24
          %s164 = ssub.s32 512, 512
          %165 = vsyncadd %s158, %s164
          %s166 = sadd.s32 %s25, %s162
          %s167 = smul.addr %s166, 128
          %s168 = scalar_lea.hbm %s1, %s167
          %s169 = sshll.u32 %s161, 4
          %s170 = int_to_ptr.vmem [resolvable:$true] %s169
          %175 = dma.hbm_to_vmem [thread:$0]  %s168, 512, %s170, %s158, 128, 128, 8
        $region24: #{tpu_custom_call.1} parent=15 // pred_fallthru
          _
      $region16: #{tpu_custom_call.1} parent=5 // pred_fallthru
        _
      %p176 = scmp.le.s32.totalorder 1, %s17
      %p177 = scmp.lt.s32.totalorder %s17, 3
      %p178 = pnand %p176, %p177
      %p179 = pneg %p178
      // Predicated region
      $region25: #{tpu_custom_call.1} parent=5 // pred_check
        _
      $region26: #{tpu_custom_call.1} parent=5 // pred_check_branch
        %181 = sbr.rel (%p178) target = $region28
      $region27: #{tpu_custom_call.1} parent=5 // pred_region
        %s182 = ssub.s32 %s17, 1
        %s183 = sand.u32 %s44, 1
        %s184 = scalar_lea.sflag [#allocation3], %s183
        %s185 = sand.u32 %s44, 1
        %s186 = smul.addr %s185, 32
        %s187 = scalar_lea.vmem [#allocation2], %s186
        // Predicated region
        $region29: #{tpu_custom_call.1} parent=27 // pred_check
          %p188 = pneg %p57
        $region30: #{tpu_custom_call.1} parent=27 // pred_check_branch
          %190 = sbr.rel (%p188) target = $region32
        $region31: #{tpu_custom_call.1} parent=27 // pred_region
          %191 = dma.done %s184, 512
        $region32: #{tpu_custom_call.1} parent=27 // pred_fallthru
          _
        %s192 = sand.u32 %s72, 1
        %s193 = scalar_lea.sflag [#allocation6], %s192
        %s194 = sand.u32 %s72, 1
        %s195 = smul.addr %s194, 32
        %s196 = scalar_lea.vmem [#allocation5], %s195
        // Predicated region
        $region33: #{tpu_custom_call.1} parent=27 // pred_check
          %p197 = pneg %p85
        $region34: #{tpu_custom_call.1} parent=27 // pred_check_branch
          %199 = sbr.rel (%p197) target = $region36
        $region35: #{tpu_custom_call.1} parent=27 // pred_region
          %200 = dma.done %s193, 512
        $region36: #{tpu_custom_call.1} parent=27 // pred_fallthru
          _
        %s201 = sand.u32 %s44, 1
        %s202 = scalar_lea.sflag [#allocation3], %s201
        %s203 = sand.u32 %s44, 1
        %s204 = smul.addr %s203, 32
        %s205 = scalar_lea.vmem [#allocation2], %s204
        %p206 = pneg %p57
        %p207 = pneg %p54
        %s208 = sand.u32 %s72, 1
        %s209 = scalar_lea.sflag [#allocation6], %s208
        %s210 = sand.u32 %s72, 1
        %s211 = smul.addr %s210, 32
        %s212 = scalar_lea.vmem [#allocation5], %s211
        %p213 = pneg %p85
        %p214 = pneg %p82
        %p215 = pneg %p113
        %p216 = pneg %p110
        %s217 = sand.u32 %s100, 1
        %s218 = scalar_lea.sflag [#allocation4], %s217
        %s219 = sand.u32 %s100, 1
        %s220 = smul.addr %s219, 8
        %s221 = scalar_lea.vmem [#allocation7], %s220
        %s222 = smul.u32 4, %s26
        %s223 = smul.u32 4, %s26
        %v224 = vld [vmem:[%s187] sm:$0xff]
        %v225 = vld [vmem:[%s187 + $0x8] sm:$0xff]
        %v226 = vld [vmem:[%s187 + $0x10] sm:$0xff]
        %v227 = vld [vmem:[%s187 + $0x18] sm:$0xff]
        %v228 = vld [vmem:[%s196] sm:$0xff]
        %v229 = vld [vmem:[%s196 + $0x8] sm:$0xff]
        %v230 = vld [vmem:[%s196 + $0x10] sm:$0xff]
        %v231 = vld [vmem:[%s196 + $0x18] sm:$0xff]
        %v232 = vmax.f32 %v224, 0.0
        %v233 = vmax.f32 %v225, 0.0
        %v234 = vmax.f32 %v226, 0.0
        %v235 = vmax.f32 %v227, 0.0
        %v236 = vand.u32 2147483647, %v224
        %v237 = vand.u32 2147483647, %v225
        %v238 = vand.u32 2147483647, %v226
        %v239 = vand.u32 2147483647, %v227
        %v240 = vsub.f32 0.0, %v236
        %v241 = vsub.f32 0.0, %v237
        %v242 = vsub.f32 0.0, %v238
        %v243 = vsub.f32 0.0, %v239
        %v244 = vmul.f32 %v240, 1.442695
        %v245 = vpow.pop %v244
        %v246 = vmul.f32 %v241, 1.442695
        %v247 = vpow.pop %v246
        %v248 = vmul.f32 %v242, 1.442695
        %v249 = vpow.pop %v248
        %v250 = vmul.f32 %v243, 1.442695
        %v251 = vpow.pop %v250
        %v252 = vadd.f32 %v245, 1.0
        %v253 = vlog2.pop %v252
        %v254 = vmul.f32 %v253, 0.6931472
        %v255 = vmul.f32 -0.5, %v245
        %v256 = vadd.f32 %v255, 1.0
        %v257 = vmul.f32 %v256, %v245
        %v258 = vand.u32 2147483647, %v245
        %vm259 = vcmp.lt.f32.partialorder %v258, 0.0004427343
        %v260 = vsel %vm259, %v257, %v254
        %v261 = vadd.f32 %v247, 1.0
        %v262 = vlog2.pop %v261
        %v263 = vmul.f32 %v262, 0.6931472
        %v264 = vmul.f32 -0.5, %v247
        %v265 = vadd.f32 %v264, 1.0
        %v266 = vmul.f32 %v265, %v247
        %v267 = vand.u32 2147483647, %v247
        %vm268 = vcmp.lt.f32.partialorder %v267, 0.0004427343
        %v269 = vsel %vm268, %v266, %v263
        %v270 = vadd.f32 %v249, 1.0
        %v271 = vlog2.pop %v270
        %v272 = vmul.f32 %v271, 0.6931472
        %v273 = vmul.f32 -0.5, %v249
        %v274 = vadd.f32 %v273, 1.0
        %v275 = vmul.f32 %v274, %v249
        %v276 = vand.u32 2147483647, %v249
        %vm277 = vcmp.lt.f32.partialorder %v276, 0.0004427343
        %v278 = vsel %vm277, %v275, %v272
        %v279 = vadd.f32 %v251, 1.0
        %v280 = vlog2.pop %v279
        %v281 = vmul.f32 %v280, 0.6931472
        %v282 = vmul.f32 -0.5, %v251
        %v283 = vadd.f32 %v282, 1.0
        %v284 = vmul.f32 %v283, %v251
        %v285 = vand.u32 2147483647, %v251
        %vm286 = vcmp.lt.f32.partialorder %v285, 0.0004427343
        %v287 = vsel %vm286, %v284, %v281
        %v288 = vadd.f32 %v232, %v260
        %v289 = vadd.f32 %v233, %v269
        %v290 = vadd.f32 %v234, %v278
        %v291 = vadd.f32 %v235, %v287
        %vm292 = vcmp.lt.f32.partialorder %v224, -88.72284
        %vm293 = vcmp.lt.f32.partialorder %v225, -88.72284
        %vm294 = vcmp.lt.f32.partialorder %v226, -88.72284
        %vm295 = vcmp.lt.f32.partialorder %v227, -88.72284
        %v296 = vsub.f32 %v288, %v224
        %v297 = vsub.f32 %v289, %v225
        %v298 = vsub.f32 %v290, %v226
        %v299 = vsub.f32 %v291, %v227
        %v300 = vmin.f32 %v296, 100.0
        %v301 = vmin.f32 %v297, 100.0
        %v302 = vmin.f32 %v298, 100.0
        %v303 = vmin.f32 %v299, 100.0
        %v304 = vsel %vm292, 100.0, %v300
        %v305 = vsel %vm293, 100.0, %v301
        %v306 = vsel %vm294, 100.0, %v302
        %v307 = vsel %vm295, 100.0, %v303
        %vm308 = vcmp.gt.f32.partialorder %v224, 16.635532
        %vm309 = vcmp.gt.f32.partialorder %v225, 16.635532
        %vm310 = vcmp.gt.f32.partialorder %v226, 16.635532
        %vm311 = vcmp.gt.f32.partialorder %v227, 16.635532
        %v312 = vmin.f32 %v288, 100.0
        %v313 = vmin.f32 %v289, 100.0
        %v314 = vmin.f32 %v290, 100.0
        %v315 = vmin.f32 %v291, 100.0
        %v316 = vsel %vm308, 100.0, %v312
        %v317 = vsel %vm309, 100.0, %v313
        %v318 = vsel %vm310, 100.0, %v314
        %v319 = vsel %vm311, 100.0, %v315
        %v320 = vsub.f32 %v304, %v316
        %v321 = vsub.f32 %v305, %v317
        %v322 = vsub.f32 %v306, %v318
        %v323 = vsub.f32 %v307, %v319
        %v324 = vmul.f32 %v228, %v320
        %v325 = vmul.f32 %v229, %v321
        %v326 = vmul.f32 %v230, %v322
        %v327 = vmul.f32 %v231, %v323
        %v328 = vadd.f32 %v316, %v324
        %v329 = vadd.f32 %v317, %v325
        %v330 = vadd.f32 %v318, %v326
        %v331 = vadd.f32 %v319, %v327
        %vm332 = vcmask 785408
        %v333 = vsel %vm332, %v328, 0.0
        %v334 = vsel %vm332, %v329, 0.0
        %v335 = vadd.f32 %v333, %v334
        %v336 = vsel %vm332, %v330, 0.0
        %v337 = vadd.f32 %v335, %v336
        %v338 = vsel %vm332, %v331, 0.0
        %v339 = vadd.f32 %v337, %v338
        %340 = vadd.xlane.f32.xlu0 %v339
        %v341 = vpop.xlane.xlu0 %340
        %v342 = vrot.slane %v341, 4
        %v343 = vadd.f32 %v341, %v342
        %v344 = vrot.slane %v343, 2
        %v345 = vadd.f32 %v343, %v344
        %v346 = vrot.slane %v345, 1
        %v347 = vadd.f32 %v345, %v346
        %s348 = vtos %v347
        %v349 = vlaneseq
        %v350 = vshrl.u32 %v349, 7
        %v351 = vlaneseq
        %v352 = vand.u32 %v351, 127
        %vm353 = vcmp.eq.s32.totalorder %v350, 0
        %vm354 = vcmp.eq.s32.totalorder %v352, 0
        %vm355 = vmand %vm353, %vm354
        %v356 = vstv %s348
        %v357 = vsel %vm355, %v356, 0.0
        %358 = vst [vmem:[%s221] sm:$0xff] %v357
        %s359 = sand.u32 %s100, 1
        %s360 = scalar_lea.sflag [#allocation4], %s359
        %s361 = sand.u32 %s100, 1
        %s362 = smul.addr %s361, 8
        %s363 = scalar_lea.vmem [#allocation7], %s362
        // Predicated region
        $region37: #{tpu_custom_call.1} parent=27 // pred_check
          %p364 = pneg %p110
        $region38: #{tpu_custom_call.1} parent=27 // pred_check_branch
          %366 = sbr.rel (%p364) target = $region40
        $region39: #{tpu_custom_call.1} parent=27 // pred_region
          %s368 = ssub.s32 128, 128
          %369 = vsyncadd %s360, %s368
          %s370 = sadd.s32 %s27, %s26
          %s371 = smul.addr %s370, 128
          %s372 = scalar_lea.hbm %s2, %s371
          %s374 = sshll.u32 %s363, 4
          %s375 = int_to_ptr.vmem [resolvable:$true] %s374
          %377 = dma.vmem_to_hbm [thread:$0]  %s375, 128, %s372, %s360
        $region40: #{tpu_custom_call.1} parent=27 // pred_fallthru
          _
      $region28: #{tpu_custom_call.1} parent=5 // pred_fallthru
        _
      %p378 = scmp.le.s32.totalorder 2, %s17
      // Predicated region
      $region41: #{tpu_custom_call.1} parent=5 // pred_check
        %p379 = pneg %p378
      $region42: #{tpu_custom_call.1} parent=5 // pred_check_branch
        %381 = sbr.rel (%p379) target = $region44
      $region43: #{tpu_custom_call.1} parent=5 // pred_region
        %s382 = ssub.s32 %s17, 2
        // Predicated region
        $region45: #{tpu_custom_call.1} parent=43 // pred_check
          %p383 = pneg %p116
        $region46: #{tpu_custom_call.1} parent=43 // pred_check_branch
          %385 = sbr.rel (%p383) target = $region48
        $region47: #{tpu_custom_call.1} parent=43 // pred_region
          %s386 = sand.u32 %s101, 1
          %s387 = scalar_lea.sflag [#allocation4], %s386
          %s388 = sand.u32 %s101, 1
          %s389 = smul.addr %s388, 8
          %s390 = scalar_lea.vmem [#allocation7], %s389
          %391 = dma.done %s387, 128
        $region48: #{tpu_custom_call.1} parent=43 // pred_fallthru
          _
      $region44: #{tpu_custom_call.1} parent=5 // pred_fallthru
        _
    $region6: #{tpu_custom_call.1} parent=1 // loop_footer
      %s21 = sadd.s32 1, %s17
    $region7: #{tpu_custom_call.1} parent=1 // loop_footer_branch
      %16 = sbr.rel target = $region3
    $region8: #{tpu_custom_call.1} parent=1 // loop_exit
      _
    %392 = vsyncpa [#allocation3], 1
    %s393 = scalar_lea.sflag [#allocation3], 1
    %394 = vsyncpa %s393, 1
    %395 = vsyncpa [#allocation6], 1
    %s396 = scalar_lea.sflag [#allocation6], 1
    %397 = vsyncpa %s396, 1
    %398 = vsyncpa [#allocation4], 1
    %s399 = scalar_lea.sflag [#allocation4], 1
    %400 = vsyncpa %s399, 1

</llo_original>
